<compile_context>
chip_gen: v7x
topology: tpu7x:2x2x1
jax: 0.10.0
libtpu: 0.0.40
codegen_flags: <defaults>
</compile_context>

<pallas_src>
import functools

import jax
import jax.numpy as jnp
from jax.experimental import pallas as pl
from jax.experimental.pallas import tpu as pltpu


def _round_up(x, m):
    return ((x + m - 1) // m) * m


def vae_fused_kernel(
    x_ref, eps_ref,
    w1_ref, b1_ref,        # encoder hidden: Linear(D_in, H) + ReLU
    wh_ref, bh_ref,        # fused heads: columns [0:L]=logvar, [L:2L]=mu
    w2_ref, b2_ref,        # decoder hidden: Linear(L, H) + ReLU
    w3_ref, b3_ref,        # decoder output: Linear(H, D_in) + sigmoid
    out_ref,               # (TB, 2L + D_in) == [logvar | mu | recon]
):
    x = x_ref[...]

    # ---- encoder ----
    h = jnp.dot(x, w1_ref[...], preferred_element_type=jnp.float32) + b1_ref[...]
    h = jnp.maximum(h, 0.0)

    # Fused mu/logvar heads: one MXU push instead of two narrow (N=L) pushes.
    heads = jnp.dot(h, wh_ref[...], preferred_element_type=jnp.float32) + bh_ref[...]
    latent = heads.shape[1] // 2
    logvar = heads[:, :latent]
    mu = heads[:, latent:]

    # ---- sampling (reparameterization trick) ----
    z = mu + eps_ref[...] * jnp.exp(0.5 * logvar)

    # ---- decoder ----
    d = jnp.dot(z, w2_ref[...], preferred_element_type=jnp.float32) + b2_ref[...]
    d = jnp.maximum(d, 0.0)
    recon = jnp.dot(d, w3_ref[...], preferred_element_type=jnp.float32) + b3_ref[...]
    recon = jax.nn.sigmoid(recon)

    # torch.cat((logvar, mu, flat_out), dim=1) fused in-register: a single
    # full-width block store (no separate XLA concat pass over the output).
    out_ref[...] = jnp.concatenate([heads, recon], axis=1)


@functools.partial(jax.jit, static_argnames=("batch_tile",))
def variational_ae_forward(x, eps, params, *, batch_tile=128):
    """VariationalAe.forward: cat([logvar, mu, sigmoid(decoder(z))], axis=1)."""
    batch, d_in = x.shape
    latent = eps.shape[1]
    hidden = params["w1"].shape[1]
    out_w = 2 * latent + d_in

    # Batch tile: multiple of 8 (f32 sublane), capped at the requested size.
    tb = min(batch_tile, _round_up(batch, 8))
    padded_b = _round_up(batch, tb)
    if padded_b != batch:
        pad = padded_b - batch
        x = jnp.pad(x, ((0, pad), (0, 0)))
        eps = jnp.pad(eps, ((0, pad), (0, 0)))
    grid = (padded_b // tb,)

    # Fuse the two latent heads into a single (H, 2L) matmul: [logvar | mu].
    wh = jnp.concatenate([params["wlv"], params["wmu"]], axis=1)
    bh = jnp.concatenate([params["blv"], params["bmu"]], axis=1)

    def rows(width):
        # Batch-tiled operand: new block per grid step -> pipelined DMA.
        return pl.BlockSpec((tb, width), lambda i: (i, 0))

    def resident(shape):
        # Same block index every step -> weights/biases stay resident in VMEM.
        return pl.BlockSpec(shape, lambda i: (0, 0))

    in_specs = [
        rows(d_in),                       # x
        rows(latent),                     # eps
        resident((d_in, hidden)),         # w1
        resident((1, hidden)),            # b1
        resident((hidden, 2 * latent)),   # wh  (fused heads)
        resident((1, 2 * latent)),        # bh
        resident((latent, hidden)),       # w2
        resident((1, hidden)),            # b2
        resident((hidden, d_in)),         # w3
        resident((1, d_in)),              # b3
    ]
    out_specs = rows(out_w)
    out_shape = jax.ShapeDtypeStruct((padded_b, out_w), jnp.float32)

    flops = 2 * padded_b * (d_in * hidden + hidden * 2 * latent
                            + latent * hidden + hidden * d_in)
    transcendentals = padded_b * (latent + d_in)          # exp + sigmoid
    weight_bytes = 4 * (d_in * hidden + hidden + hidden * 2 * latent
                        + 2 * latent + latent * hidden + hidden
                        + hidden * d_in + d_in)
    io_bytes = 4 * padded_b * (d_in + latent + out_w)
    cost = pl.CostEstimate(flops=flops, transcendentals=transcendentals,
                           bytes_accessed=weight_bytes + io_bytes)

    out = pl.pallas_call(
        vae_fused_kernel,
        out_shape=out_shape,
        grid=grid,
        in_specs=in_specs,
        out_specs=out_specs,
        compiler_params=pltpu.CompilerParams(
            dimension_semantics=("parallel",),      # megacore-shardable on v7x
            vmem_limit_bytes=32 * 1024 * 1024,      # well within v5e/v6e/v7x limits
        ),
        cost_estimate=cost,
    )(x, eps, params["w1"], params["b1"], wh, bh,
      params["w2"], params["b2"], params["w3"], params["b3"])

    # Output is already [logvar | mu | recon]; only slice off batch padding.
    return out[:batch]


def init_params(key, d_in, hidden, latent):
    ks = jax.random.split(key, 5)
    scale = 0.05
    return {
        "w1": scale * jax.random.normal(ks[0], (d_in, hidden), jnp.float32),
        "b1": jnp.zeros((1, hidden), jnp.float32),
        "wmu": scale * jax.random.normal(ks[1], (hidden, latent), jnp.float32),
        "bmu": jnp.zeros((1, latent), jnp.float32),
        "wlv": scale * jax.random.normal(ks[2], (hidden, latent), jnp.float32),
        "blv": jnp.zeros((1, latent), jnp.float32),
        "w2": scale * jax.random.normal(ks[3], (latent, hidden), jnp.float32),
        "b2": jnp.zeros((1, hidden), jnp.float32),
        "w3": scale * jax.random.normal(ks[4], (hidden, d_in), jnp.float32),
        "b3": jnp.zeros((1, d_in), jnp.float32),
    }


def reference_forward(x, eps, params):
    hp = jax.lax.Precision.HIGHEST
    h = jnp.maximum(jnp.dot(x, params["w1"], precision=hp) + params["b1"], 0.0)
    mu = jnp.dot(h, params["wmu"], precision=hp) + params["bmu"]
    logvar = jnp.dot(h, params["wlv"], precision=hp) + params["blv"]
    z = mu + eps * jnp.exp(0.5 * logvar)
    d = jnp.maximum(jnp.dot(z, params["w2"], precision=hp) + params["b2"], 0.0)
    recon = jax.nn.sigmoid(jnp.dot(d, params["w3"], precision=hp) + params["b3"])
    return jnp.concatenate([logvar, mu, recon], axis=1)


if __name__ == "__main__":
    # Small but vreg/MXU-friendly dims (D_in = H = 128, batch a multiple of 8).
    B, D_IN, HIDDEN, LATENT = 64, 128, 128, 8

    key = jax.random.PRNGKey(0)
    k_x, k_eps, k_params = jax.random.split(key, 3)

    x = jax.random.normal(k_x, (B, D_IN), jnp.float32)
    eps = jax.random.normal(k_eps, (B, LATENT), jnp.float32)   # torch.randn_like(std)
    params = init_params(k_params, D_IN, HIDDEN, LATENT)

    out = jax.block_until_ready(variational_ae_forward(x, eps, params, batch_tile=128))
    assert out.shape == (B, 2 * LATENT + D_IN), out.shape
    ref = reference_forward(x, eps, params)
    assert jnp.allclose(out, ref, atol=1e-4, rtol=1e-4), (
        "mismatch vs reference, max abs err = "
        + str(float(jnp.max(jnp.abs(out - ref)))))

    # Also exercise a tiny, non-tile-aligned batch (pads rows up to a sublane
    # multiple and slices the padding back off).
    xs, es = x[:3], eps[:3]
    out_small = jax.block_until_ready(variational_ae_forward(xs, es, params))
    ref_small = reference_forward(xs, es, params)
    assert out_small.shape == (3, 2 * LATENT + D_IN), out_small.shape
    assert jnp.allclose(out_small, ref_small, atol=1e-4, rtol=1e-4), "small-batch mismatch"

    print("KERNEL_OK")
</pallas_src>

<mosaic_0001>
module attributes {stable_mosaic.version = 11 : i64} {
  func.func @vae_fused_kernel(%arg0: i32, %arg1: memref<64x128xf32, #tpu.memory_space<vmem>>, %arg2: memref<64x8xf32, #tpu.memory_space<vmem>>, %arg3: memref<128x128xf32, #tpu.memory_space<vmem>>, %arg4: memref<1x128xf32, #tpu.memory_space<vmem>>, %arg5: memref<128x16xf32, #tpu.memory_space<vmem>>, %arg6: memref<1x16xf32, #tpu.memory_space<vmem>>, %arg7: memref<8x128xf32, #tpu.memory_space<vmem>>, %arg8: memref<1x128xf32, #tpu.memory_space<vmem>>, %arg9: memref<128x128xf32, #tpu.memory_space<vmem>>, %arg10: memref<1x128xf32, #tpu.memory_space<vmem>>, %arg11: memref<64x144xf32, #tpu.memory_space<vmem>>) attributes {dimension_semantics = [#tpu.dimension_semantics<parallel>], iteration_bounds = array<i64: 1>, scalar_prefetch = 0 : i64, scratch_operands = 0 : i64, tpu.core_type = #tpu.core_type<tc>, window_params = [{transform_indices = @transform_0, window_bounds = array<i64: 64, 128>}, {transform_indices = @transform_1, window_bounds = array<i64: 64, 8>}, {pipeline_mode = #tpu.pipeline_mode<synchronous>, transform_indices = @transform_2, window_bounds = array<i64: 128, 128>}, {pipeline_mode = #tpu.pipeline_mode<synchronous>, transform_indices = @transform_3, window_bounds = array<i64: 1, 128>}, {pipeline_mode = #tpu.pipeline_mode<synchronous>, transform_indices = @transform_4, window_bounds = array<i64: 128, 16>}, {pipeline_mode = #tpu.pipeline_mode<synchronous>, transform_indices = @transform_5, window_bounds = array<i64: 1, 16>}, {pipeline_mode = #tpu.pipeline_mode<synchronous>, transform_indices = @transform_6, window_bounds = array<i64: 8, 128>}, {pipeline_mode = #tpu.pipeline_mode<synchronous>, transform_indices = @transform_7, window_bounds = array<i64: 1, 128>}, {pipeline_mode = #tpu.pipeline_mode<synchronous>, transform_indices = @transform_8, window_bounds = array<i64: 128, 128>}, {pipeline_mode = #tpu.pipeline_mode<synchronous>, transform_indices = @transform_9, window_bounds = array<i64: 1, 128>}, {transform_indices = @transform_10, window_bounds = array<i64: 64, 144>}]} {
    %c0 = arith.constant 0 : index
    %c0_0 = arith.constant 0 : index
    %0 = vector.load %arg1[%c0, %c0_0] : memref<64x128xf32, #tpu.memory_space<vmem>>, vector<64x128xf32>
    %c0_1 = arith.constant 0 : index
    %c0_2 = arith.constant 0 : index
    %1 = vector.load %arg3[%c0_1, %c0_2] : memref<128x128xf32, #tpu.memory_space<vmem>>, vector<128x128xf32>
    %cst = arith.constant dense<0.000000e+00> : vector<64x128xf32>
    %2 = tpu.matmul %0, %1, %cst {dimension_numbers = #tpu.dot_dimension_numbers<[1], [0], [0], [1], [0, 0, 1, 1], [], []>} : vector<64x128xf32>, vector<128x128xf32>, vector<64x128xf32> -> vector<64x128xf32>
    %c0_3 = arith.constant 0 : index
    %c0_4 = arith.constant 0 : index
    %3 = vector.load %arg4[%c0_3, %c0_4] : memref<1x128xf32, #tpu.memory_space<vmem>>, vector<1x128xf32>
    %4 = vector.broadcast %3 : vector<1x128xf32> to vector<64x128xf32>
    %5 = arith.addf %2, %4 : vector<64x128xf32>
    %cst_5 = arith.constant 0.000000e+00 : f32
    %6 = vector.broadcast %cst_5 : f32 to vector<64x128xf32>
    %7 = arith.maximumf %5, %6 : vector<64x128xf32>
    %c0_6 = arith.constant 0 : index
    %c0_7 = arith.constant 0 : index
    %8 = vector.load %arg5[%c0_6, %c0_7] : memref<128x16xf32, #tpu.memory_space<vmem>>, vector<128x16xf32>
    %cst_8 = arith.constant dense<0.000000e+00> : vector<64x16xf32>
    %9 = tpu.matmul %7, %8, %cst_8 {dimension_numbers = #tpu.dot_dimension_numbers<[1], [0], [0], [1], [0, 0, 1, 1], [], []>} : vector<64x128xf32>, vector<128x16xf32>, vector<64x16xf32> -> vector<64x16xf32>
    %c0_9 = arith.constant 0 : index
    %c0_10 = arith.constant 0 : index
    %10 = vector.load %arg6[%c0_9, %c0_10] : memref<1x16xf32, #tpu.memory_space<vmem>>, vector<1x16xf32>
    %11 = vector.broadcast %10 : vector<1x16xf32> to vector<64x16xf32>
    %12 = arith.addf %9, %11 : vector<64x16xf32>
    %13 = vector.extract_strided_slice %12 {offsets = [0, 0], sizes = [64, 8], strides = [1, 1]} : vector<64x16xf32> to vector<64x8xf32>
    %14 = vector.extract_strided_slice %12 {offsets = [0, 8], sizes = [64, 8], strides = [1, 1]} : vector<64x16xf32> to vector<64x8xf32>
    %c0_11 = arith.constant 0 : index
    %c0_12 = arith.constant 0 : index
    %15 = vector.load %arg2[%c0_11, %c0_12] : memref<64x8xf32, #tpu.memory_space<vmem>>, vector<64x8xf32>
    %cst_13 = arith.constant 5.000000e-01 : f32
    %16 = vector.broadcast %cst_13 : f32 to vector<64x8xf32>
    %17 = arith.mulf %16, %13 : vector<64x8xf32>
    %18 = math.exp %17 : vector<64x8xf32>
    %19 = arith.mulf %15, %18 : vector<64x8xf32>
    %20 = arith.addf %14, %19 : vector<64x8xf32>
    %c0_14 = arith.constant 0 : index
    %c0_15 = arith.constant 0 : index
    %21 = vector.load %arg7[%c0_14, %c0_15] : memref<8x128xf32, #tpu.memory_space<vmem>>, vector<8x128xf32>
    %cst_16 = arith.constant dense<0.000000e+00> : vector<64x128xf32>
    %22 = tpu.matmul %20, %21, %cst_16 {dimension_numbers = #tpu.dot_dimension_numbers<[1], [0], [0], [1], [0, 0, 1, 1], [], []>} : vector<64x8xf32>, vector<8x128xf32>, vector<64x128xf32> -> vector<64x128xf32>
    %c0_17 = arith.constant 0 : index
    %c0_18 = arith.constant 0 : index
    %23 = vector.load %arg8[%c0_17, %c0_18] : memref<1x128xf32, #tpu.memory_space<vmem>>, vector<1x128xf32>
    %24 = vector.broadcast %23 : vector<1x128xf32> to vector<64x128xf32>
    %25 = arith.addf %22, %24 : vector<64x128xf32>
    %cst_19 = arith.constant 0.000000e+00 : f32
    %26 = vector.broadcast %cst_19 : f32 to vector<64x128xf32>
    %27 = arith.maximumf %25, %26 : vector<64x128xf32>
    %c0_20 = arith.constant 0 : index
    %c0_21 = arith.constant 0 : index
    %28 = vector.load %arg9[%c0_20, %c0_21] : memref<128x128xf32, #tpu.memory_space<vmem>>, vector<128x128xf32>
    %cst_22 = arith.constant dense<0.000000e+00> : vector<64x128xf32>
    %29 = tpu.matmul %27, %28, %cst_22 {dimension_numbers = #tpu.dot_dimension_numbers<[1], [0], [0], [1], [0, 0, 1, 1], [], []>} : vector<64x128xf32>, vector<128x128xf32>, vector<64x128xf32> -> vector<64x128xf32>
    %c0_23 = arith.constant 0 : index
    %c0_24 = arith.constant 0 : index
    %30 = vector.load %arg10[%c0_23, %c0_24] : memref<1x128xf32, #tpu.memory_space<vmem>>, vector<1x128xf32>
    %31 = vector.broadcast %30 : vector<1x128xf32> to vector<64x128xf32>
    %32 = arith.addf %29, %31 : vector<64x128xf32>
    %33 = arith.negf %32 : vector<64x128xf32>
    %34 = math.exp %33 : vector<64x128xf32>
    %cst_25 = arith.constant 1.000000e+00 : f32
    %35 = vector.broadcast %cst_25 : f32 to vector<64x128xf32>
    %36 = arith.addf %35, %34 : vector<64x128xf32>
    %37 = arith.divf %35, %36 : vector<64x128xf32>
    %38 = tpu.concatenate %12, %37 in 1 : vector<64x16xf32>, vector<64x128xf32> -> vector<64x144xf32>
    %c0_26 = arith.constant 0 : index
    %c0_27 = arith.constant 0 : index
    %39 = vector.load %arg11[%c0_26, %c0_27] : memref<64x144xf32, #tpu.memory_space<vmem>>, vector<64x144xf32>
    tpu.vector_store %arg11[%c0_26, %c0_27], %38 {strides = array<i32>} : memref<64x144xf32, #tpu.memory_space<vmem>>, vector<64x144xf32>,
    return
  }
  func.func @transform_0(%arg0: i32) -> (i32, i32) {
    %c0_i32 = arith.constant 0 : i32
    %c0_i32_0 = arith.constant 0 : i32
    return %arg0, %c0_i32 : i32, i32
  }
  func.func @transform_1(%arg0: i32) -> (i32, i32) {
    %c0_i32 = arith.constant 0 : i32
    %c0_i32_0 = arith.constant 0 : i32
    return %arg0, %c0_i32 : i32, i32
  }
  func.func @transform_2(%arg0: i32) -> (i32, i32) {
    %c0_i32 = arith.constant 0 : i32
    %c0_i32_0 = arith.constant 0 : i32
    %c0_i32_1 = arith.constant 0 : i32
    return %c0_i32, %c0_i32_0 : i32, i32
  }
  func.func @transform_3(%arg0: i32) -> (i32, i32) {
    %c0_i32 = arith.constant 0 : i32
    %c0_i32_0 = arith.constant 0 : i32
    %c0_i32_1 = arith.constant 0 : i32
    return %c0_i32, %c0_i32_0 : i32, i32
  }
  func.func @transform_4(%arg0: i32) -> (i32, i32) {
    %c0_i32 = arith.constant 0 : i32
    %c0_i32_0 = arith.constant 0 : i32
    %c0_i32_1 = arith.constant 0 : i32
    return %c0_i32, %c0_i32_0 : i32, i32
  }
  func.func @transform_5(%arg0: i32) -> (i32, i32) {
    %c0_i32 = arith.constant 0 : i32
    %c0_i32_0 = arith.constant 0 : i32
    %c0_i32_1 = arith.constant 0 : i32
    return %c0_i32, %c0_i32_0 : i32, i32
  }
  func.func @transform_6(%arg0: i32) -> (i32, i32) {
    %c0_i32 = arith.constant 0 : i32
    %c0_i32_0 = arith.constant 0 : i32
    %c0_i32_1 = arith.constant 0 : i32
    return %c0_i32, %c0_i32_0 : i32, i32
  }
  func.func @transform_7(%arg0: i32) -> (i32, i32) {
    %c0_i32 = arith.constant 0 : i32
    %c0_i32_0 = arith.constant 0 : i32
    %c0_i32_1 = arith.constant 0 : i32
    return %c0_i32, %c0_i32_0 : i32, i32
  }
  func.func @transform_8(%arg0: i32) -> (i32, i32) {
    %c0_i32 = arith.constant 0 : i32
    %c0_i32_0 = arith.constant 0 : i32
    %c0_i32_1 = arith.constant 0 : i32
    return %c0_i32, %c0_i32_0 : i32, i32
  }
  func.func @transform_9(%arg0: i32) -> (i32, i32) {
    %c0_i32 = arith.constant 0 : i32
    %c0_i32_0 = arith.constant 0 : i32
    %c0_i32_1 = arith.constant 0 : i32
    return %c0_i32, %c0_i32_0 : i32, i32
  }
  func.func @transform_10(%arg0: i32) -> (i32, i32) {
    %c0_i32 = arith.constant 0 : i32
    %c0_i32_0 = arith.constant 0 : i32
    return %arg0, %c0_i32 : i32, i32
  }
}

</mosaic_0001>

<llo_original>
// kernel: variational_ae_forward.1
$region0: #{variational_ae_forward.1}
  #allocation0 [shape = 'u32[]', space=smem, size = 0x4, offset = 0x4, fixed_abs, tag = 'smem constant byte address 0x4 - core index']
  #allocation1 [shape = 'u32[144,128]{1,0:T(1,128)}', space=vmem, size = 0x12000, scoped, tag = 'internal scratch']
  %s0 = inlined_call_operand.hbm [shape: f32[64,128], index: 0, kind: input, shape index: {}]
  %s1 = inlined_call_operand.vmem [shape: f32[64,8], index: 1, kind: input, shape index: {}]
  %s2 = inlined_call_operand.vmem [shape: f32[128,128], index: 2, kind: input, shape index: {}]
  %s3 = inlined_call_operand.vmem [shape: f32[1,128], index: 3, kind: input, shape index: {}]
  %s4 = inlined_call_operand.vmem [shape: f32[128,16], index: 4, kind: input, shape index: {}]
  %s5 = inlined_call_operand.vmem [shape: f32[1,16], index: 5, kind: input, shape index: {}]
  %s6 = inlined_call_operand.vmem [shape: f32[8,128], index: 6, kind: input, shape index: {}]
  %s7 = inlined_call_operand.vmem [shape: f32[1,128], index: 7, kind: input, shape index: {}]
  %s8 = inlined_call_operand.vmem [shape: f32[128,128], index: 8, kind: input, shape index: {}]
  %s9 = inlined_call_operand.hbm [shape: f32[1,128], index: 9, kind: input, shape index: {}]
  %s10 = inlined_call_operand.hbm [shape: f32[64,144], index: 10, kind: output, shape index: {}]
  %s11 = sld [smem:[#allocation0]]
  $region58: #{variational_ae_forward.1} parent=0
    _
  %s13 = ssub.s32 1, %s11
  %s14 = scalar_select 0, %s13, %s11
  $region1: #{variational_ae_forward.1} parent=0
    #allocation2 [shape = 'u8[32768]{0}', space=vmem, size = 0x8000, scoped, tag = 'input window, operand 0, single buffered']
    #allocation3 [shape = 's32[1]{0}', space=sflag, size = 0x4, scoped, tag = 'scoped memory for variational_ae_forward.1']
    #allocation4 [shape = 's32[1]{0}', space=sflag, size = 0x4, scoped, tag = 'scoped memory for variational_ae_forward.1']
    #allocation5 [shape = 'u8[512]{0}', space=vmem, size = 0x400, scoped, tag = 'input window, operand 9, single buffered']
    #allocation6 [shape = 's32[1]{0}', space=sflag, size = 0x4, scoped, tag = 'scoped memory for variational_ae_forward.1']
    #allocation7 [shape = 'u8[65536]{0}', space=vmem, size = 0x10000, scoped, tag = 'output window, operand 0, single buffered']
    %15 = vsyncpa [#allocation3], 0
    %16 = vsyncpa [#allocation6], 0
    %17 = vsyncpa [#allocation4], 0
    // Predicated region
    $region2: #{variational_ae_forward.1} parent=1 // pred_check
      _
    $region3: #{variational_ae_forward.1} parent=1 // pred_check_branch
      %19 = sbr.rel (0) target = $region5
    $region4: #{variational_ae_forward.1} parent=1 // pred_region
      %s21 = ssub.s32 1024, 1024
      %22 = vsyncadd [#allocation3], %s21
      %s23 = sshll.u32 [#allocation2], 4
      %s24 = int_to_ptr.vmem [resolvable:$true] %s23
      %29 = dma.hbm_to_vmem [thread:$0]  %s0, 1024, %s24, [#allocation3], 128, 128, 8
    $region5: #{variational_ae_forward.1} parent=1 // pred_fallthru
      _
    // Predicated region
    $region6: #{variational_ae_forward.1} parent=1 // pred_check
      _
    $region7: #{variational_ae_forward.1} parent=1 // pred_check_branch
      %31 = sbr.rel (0) target = $region9
    $region8: #{variational_ae_forward.1} parent=1 // pred_region
      _
    $region9: #{variational_ae_forward.1} parent=1 // pred_fallthru
      _
    // Predicated region
    $region10: #{variational_ae_forward.1} parent=1 // pred_check
      _
    $region11: #{variational_ae_forward.1} parent=1 // pred_check_branch
      %33 = sbr.rel (0) target = $region13
    $region12: #{variational_ae_forward.1} parent=1 // pred_region
      _
    $region13: #{variational_ae_forward.1} parent=1 // pred_fallthru
      _
    // Predicated region
    $region14: #{variational_ae_forward.1} parent=1 // pred_check
      _
    $region15: #{variational_ae_forward.1} parent=1 // pred_check_branch
      %35 = sbr.rel (0) target = $region17
    $region16: #{variational_ae_forward.1} parent=1 // pred_region
      _
    $region17: #{variational_ae_forward.1} parent=1 // pred_fallthru
      _
    // Predicated region
    $region18: #{variational_ae_forward.1} parent=1 // pred_check
      _
    $region19: #{variational_ae_forward.1} parent=1 // pred_check_branch
      %37 = sbr.rel (0) target = $region21
    $region20: #{variational_ae_forward.1} parent=1 // pred_region
      _
    $region21: #{variational_ae_forward.1} parent=1 // pred_fallthru
      _
    // Predicated region
    $region22: #{variational_ae_forward.1} parent=1 // pred_check
      _
    $region23: #{variational_ae_forward.1} parent=1 // pred_check_branch
      %39 = sbr.rel (0) target = $region25
    $region24: #{variational_ae_forward.1} parent=1 // pred_region
      _
    $region25: #{variational_ae_forward.1} parent=1 // pred_fallthru
      _
    // Predicated region
    $region26: #{variational_ae_forward.1} parent=1 // pred_check
      _
    $region27: #{variational_ae_forward.1} parent=1 // pred_check_branch
      %41 = sbr.rel (0) target = $region29
    $region28: #{variational_ae_forward.1} parent=1 // pred_region
      _
    $region29: #{variational_ae_forward.1} parent=1 // pred_fallthru
      _
    // Predicated region
    $region30: #{variational_ae_forward.1} parent=1 // pred_check
      _
    $region31: #{variational_ae_forward.1} parent=1 // pred_check_branch
      %43 = sbr.rel (0) target = $region33
    $region32: #{variational_ae_forward.1} parent=1 // pred_region
      _
    $region33: #{variational_ae_forward.1} parent=1 // pred_fallthru
      _
    // Predicated region
    $region34: #{variational_ae_forward.1} parent=1 // pred_check
      _
    $region35: #{variational_ae_forward.1} parent=1 // pred_check_branch
      %45 = sbr.rel (0) target = $region37
    $region36: #{variational_ae_forward.1} parent=1 // pred_region
      _
    $region37: #{variational_ae_forward.1} parent=1 // pred_fallthru
      _
    // Predicated region
    $region38: #{variational_ae_forward.1} parent=1 // pred_check
      _
    $region39: #{variational_ae_forward.1} parent=1 // pred_check_branch
      %47 = sbr.rel (0) target = $region41
    $region40: #{variational_ae_forward.1} parent=1 // pred_region
      %s49 = ssub.s32 16, 16
      %50 = vsyncadd [#allocation6], %s49
      %s52 = sshll.u32 [#allocation5], 4
      %s53 = int_to_ptr.vmem [resolvable:$true] %s52
      %55 = dma.hbm_to_vmem [thread:$0]  %s9, 16, %s53, [#allocation6]
    $region41: #{variational_ae_forward.1} parent=1 // pred_fallthru
      _
    // Predicated region
    $region42: #{variational_ae_forward.1} parent=1 // pred_check
      _
    $region43: #{variational_ae_forward.1} parent=1 // pred_check_branch
      %57 = sbr.rel (0) target = $region45
    $region44: #{variational_ae_forward.1} parent=1 // pred_region
      %58 = dma.done [#allocation3], 1024
    $region45: #{variational_ae_forward.1} parent=1 // pred_fallthru
      _
    // Predicated region
    $region46: #{variational_ae_forward.1} parent=1 // pred_check
      _
    $region47: #{variational_ae_forward.1} parent=1 // pred_check_branch
      %60 = sbr.rel (0) target = $region49
    $region48: #{variational_ae_forward.1} parent=1 // pred_region
      %61 = dma.done [#allocation6], 16
    $region49: #{variational_ae_forward.1} parent=1 // pred_fallthru
      _
    %v62 = vld [vmem:[#allocation2] sm:$0xff]
    %v63 = vld [vmem:[#allocation2 + $0x8] sm:$0xff]
    %v64 = vld [vmem:[#allocation2 + $0x10] sm:$0xff]
    %v65 = vld [vmem:[#allocation2 + $0x18] sm:$0xff]
    %v66 = vld [vmem:[#allocation2 + $0x20] sm:$0xff]
    %v67 = vld [vmem:[#allocation2 + $0x28] sm:$0xff]
    %v68 = vld [vmem:[#allocation2 + $0x30] sm:$0xff]
    %v69 = vld [vmem:[#allocation2 + $0x38] sm:$0xff]
    %v70 = vld [vmem:[%s2] sm:$0xff]
    %v71 = vld [vmem:[%s2 + $0x8] sm:$0xff]
    %v72 = vld [vmem:[%s2 + $0x10] sm:$0xff]
    %v73 = vld [vmem:[%s2 + $0x18] sm:$0xff]
    %v74 = vld [vmem:[%s2 + $0x20] sm:$0xff]
    %v75 = vld [vmem:[%s2 + $0x28] sm:$0xff]
    %v76 = vld [vmem:[%s2 + $0x30] sm:$0xff]
    %v77 = vld [vmem:[%s2 + $0x38] sm:$0xff]
    %v78 = vld [vmem:[%s2 + $0x40] sm:$0xff]
    %v79 = vld [vmem:[%s2 + $0x48] sm:$0xff]
    %v80 = vld [vmem:[%s2 + $0x50] sm:$0xff]
    %v81 = vld [vmem:[%s2 + $0x58] sm:$0xff]
    %v82 = vld [vmem:[%s2 + $0x60] sm:$0xff]
    %v83 = vld [vmem:[%s2 + $0x68] sm:$0xff]
    %v84 = vld [vmem:[%s2 + $0x70] sm:$0xff]
    %v85 = vld [vmem:[%s2 + $0x78] sm:$0xff]
    %v86 = vld [vmem:[%s3] sm:$0x1]
    %v88 = vlaneseq
    %v89 = vshrl.u32 %v88, 7
    %v90 = vsub.s32 0, %v89
    %v91 = vrot.slane %v86, %v90
    %93 = vmatprep.subr.mxu0 0.0
    %94 = vmatpush1.msra.mxu0 %v70
    %95 = vmatprep.subr.mxu0 0.0
    %96 = vmatpush1.msra.mxu0 %v71
    %97 = vmatprep.subr.mxu0 0.0
    %98 = vmatpush1.msra.mxu0 %v72
    %99 = vmatprep.subr.mxu0 0.0
    %100 = vmatpush1.msra.mxu0 %v73
    %101 = vmatprep.subr.mxu0 0.0
    %102 = vmatpush1.msra.mxu0 %v74
    %103 = vmatprep.subr.mxu0 0.0
    %104 = vmatpush1.msra.mxu0 %v75
    %105 = vmatprep.subr.mxu0 0.0
    %106 = vmatpush1.msra.mxu0 %v76
    %107 = vmatprep.subr.mxu0 0.0
    %108 = vmatpush1.msra.mxu0 %v77
    %109 = vmatprep.subr.mxu0 0.0
    %110 = vmatpush1.msra.mxu0 %v78
    %111 = vmatprep.subr.mxu0 0.0
    %112 = vmatpush1.msra.mxu0 %v79
    %113 = vmatprep.subr.mxu0 0.0
    %114 = vmatpush1.msra.mxu0 %v80
    %115 = vmatprep.subr.mxu0 0.0
    %116 = vmatpush1.msra.mxu0 %v81
    %117 = vmatprep.subr.mxu0 0.0
    %118 = vmatpush1.msra.mxu0 %v82
    %119 = vmatprep.subr.mxu0 0.0
    %120 = vmatpush1.msra.mxu0 %v83
    %121 = vmatprep.subr.mxu0 0.0
    %122 = vmatpush1.msra.mxu0 %v84
    %123 = vmatprep.subr.mxu0 0.0
    %124 = vmatpush1.msra.mxu0 %v85
    %125 = vmatprep.subr.mxu0 0.0
    %126 = vmatpush1.msra.mxu0 0.0
    %127 = vmatprep.subr.mxu0 0.0
    %128 = vmatpush1.msra.mxu0 0.0
    %129 = vmatprep.subr.mxu0 0.0
    %130 = vmatpush1.msra.mxu0 0.0
    %131 = vmatprep.subr.mxu0 0.0
    %132 = vmatpush1.msra.mxu0 0.0
    %133 = vmatprep.subr.mxu0 0.0
    %134 = vmatpush1.msra.mxu0 0.0
    %135 = vmatprep.subr.mxu0 0.0
    %136 = vmatpush1.msra.mxu0 0.0
    %137 = vmatprep.subr.mxu0 0.0
    %138 = vmatpush1.msra.mxu0 0.0
    %139 = vmatprep.subr.mxu0 0.0
    %140 = vmatpush1.msra.mxu0 0.0
    %141 = vmatprep.subr.mxu0 0.0
    %142 = vmatpush1.msra.mxu0 0.0
    %143 = vmatprep.subr.mxu0 0.0
    %144 = vmatpush1.msra.mxu0 0.0
    %145 = vmatprep.subr.mxu0 0.0
    %146 = vmatpush1.msra.mxu0 0.0
    %147 = vmatprep.subr.mxu0 0.0
    %148 = vmatpush1.msra.mxu0 0.0
    %149 = vmatprep.subr.mxu0 0.0
    %150 = vmatpush1.msra.mxu0 0.0
    %151 = vmatprep.subr.mxu0 0.0
    %152 = vmatpush1.msra.mxu0 0.0
    %153 = vmatprep.subr.mxu0 0.0
    %154 = vmatpush1.msra.mxu0 0.0
    %155 = vmatprep.subr.mxu0 0.0
    %156 = vmatpush1.msra.mxu0 0.0
    %157 = vmatprep.mubr.f32.mxu0 0.0
    %158 = vmatmul.mubr.f32.gmra.mrb[0].mxu0 %v62
    %v159 = vpop.f32.mrb[0].mxu0
    %v160 = vadd.f32 %v91, %v159
    %v161 = vpop.f32.mrb[0].mxu0
    %162 = vmatprep.mubr.f32.mxu0 0.0
    %163 = vmatmul.mubr.f32.gmra.mrb[0].mxu0 %v63
    %v164 = vpop.f32.mrb[0].mxu0
    %v165 = vadd.f32 %v91, %v164
    %v166 = vpop.f32.mrb[0].mxu0
    %167 = vmatprep.mubr.f32.mxu0 0.0
    %168 = vmatmul.mubr.f32.gmra.mrb[0].mxu0 %v64
    %v169 = vpop.f32.mrb[0].mxu0
    %v170 = vadd.f32 %v91, %v169
    %v171 = vpop.f32.mrb[0].mxu0
    %172 = vmatprep.mubr.f32.mxu0 0.0
    %173 = vmatmul.mubr.f32.gmra.mrb[0].mxu0 %v65
    %v174 = vpop.f32.mrb[0].mxu0
    %v175 = vadd.f32 %v91, %v174
    %v176 = vpop.f32.mrb[0].mxu0
    %177 = vmatprep.mubr.f32.mxu0 0.0
    %178 = vmatmul.mubr.f32.gmra.mrb[0].mxu0 %v66
    %v179 = vpop.f32.mrb[0].mxu0
    %v180 = vadd.f32 %v91, %v179
    %v181 = vpop.f32.mrb[0].mxu0
    %182 = vmatprep.mubr.f32.mxu0 0.0
    %183 = vmatmul.mubr.f32.gmra.mrb[0].mxu0 %v67
    %v184 = vpop.f32.mrb[0].mxu0
    %v185 = vadd.f32 %v91, %v184
    %v186 = vpop.f32.mrb[0].mxu0
    %187 = vmatprep.mubr.f32.mxu0 0.0
    %188 = vmatmul.mubr.f32.gmra.mrb[0].mxu0 %v68
    %v189 = vpop.f32.mrb[0].mxu0
    %v190 = vadd.f32 %v91, %v189
    %v191 = vpop.f32.mrb[0].mxu0
    %192 = vmatprep.mubr.f32.mxu0 0.0
    %193 = vmatmul.mubr.f32.gmra.mrb[0].mxu0 %v69
    %v194 = vpop.f32.mrb[0].mxu0
    %v195 = vadd.f32 %v91, %v194
    %v196 = vpop.f32.mrb[0].mxu0
    %197 = vdwg.mxu0
    %v198 = vmax.f32 %v160, 0.0
    %v199 = vmax.f32 %v165, 0.0
    %v200 = vmax.f32 %v170, 0.0
    %v201 = vmax.f32 %v175, 0.0
    %v202 = vmax.f32 %v180, 0.0
    %v203 = vmax.f32 %v185, 0.0
    %v204 = vmax.f32 %v190, 0.0
    %v205 = vmax.f32 %v195, 0.0
    %v206 = vld [vmem:[%s4] sm:$0xff]
    %v207 = vld [vmem:[%s4 + $0x8] sm:$0xff]
    %v208 = vld [vmem:[%s4 + $0x10] sm:$0xff]
    %v209 = vld [vmem:[%s4 + $0x18] sm:$0xff]
    %v210 = vld [vmem:[%s4 + $0x20] sm:$0xff]
    %v211 = vld [vmem:[%s4 + $0x28] sm:$0xff]
    %v212 = vld [vmem:[%s4 + $0x30] sm:$0xff]
    %v213 = vld [vmem:[%s4 + $0x38] sm:$0xff]
    %v214 = vld [vmem:[%s4 + $0x40] sm:$0xff]
    %v215 = vld [vmem:[%s4 + $0x48] sm:$0xff]
    %v216 = vld [vmem:[%s4 + $0x50] sm:$0xff]
    %v217 = vld [vmem:[%s4 + $0x58] sm:$0xff]
    %v218 = vld [vmem:[%s4 + $0x60] sm:$0xff]
    %v219 = vld [vmem:[%s4 + $0x68] sm:$0xff]
    %v220 = vld [vmem:[%s4 + $0x70] sm:$0xff]
    %v221 = vld [vmem:[%s4 + $0x78] sm:$0xff]
    %v222 = vld [vmem:[%s5] sm:$0x1]
    %v224 = vlaneseq
    %v225 = vshrl.u32 %v224, 7
    %v226 = vsub.s32 0, %v225
    %v227 = vrot.slane %v222, %v226
    %229 = vmatprep.subr.mxu0 0.0
    %230 = vmatpush1.msra.mxu0 %v206
    %231 = vmatprep.subr.mxu0 0.0
    %232 = vmatpush1.msra.mxu0 %v207
    %233 = vmatprep.subr.mxu0 0.0
    %234 = vmatpush1.msra.mxu0 %v208
    %235 = vmatprep.subr.mxu0 0.0
    %236 = vmatpush1.msra.mxu0 %v209
    %237 = vmatprep.subr.mxu0 0.0
    %238 = vmatpush1.msra.mxu0 %v210
    %239 = vmatprep.subr.mxu0 0.0
    %240 = vmatpush1.msra.mxu0 %v211
    %241 = vmatprep.subr.mxu0 0.0
    %242 = vmatpush1.msra.mxu0 %v212
    %243 = vmatprep.subr.mxu0 0.0
    %244 = vmatpush1.msra.mxu0 %v213
    %245 = vmatprep.subr.mxu0 0.0
    %246 = vmatpush1.msra.mxu0 %v214
    %247 = vmatprep.subr.mxu0 0.0
    %248 = vmatpush1.msra.mxu0 %v215
    %249 = vmatprep.subr.mxu0 0.0
    %250 = vmatpush1.msra.mxu0 %v216
    %251 = vmatprep.subr.mxu0 0.0
    %252 = vmatpush1.msra.mxu0 %v217
    %253 = vmatprep.subr.mxu0 0.0
    %254 = vmatpush1.msra.mxu0 %v218
    %255 = vmatprep.subr.mxu0 0.0
    %256 = vmatpush1.msra.mxu0 %v219
    %257 = vmatprep.subr.mxu0 0.0
    %258 = vmatpush1.msra.mxu0 %v220
    %259 = vmatprep.subr.mxu0 0.0
    %260 = vmatpush1.msra.mxu0 %v221
    %261 = vmatprep.subr.mxu0 0.0
    %262 = vmatpush1.msra.mxu0 0.0
    %263 = vmatprep.subr.mxu0 0.0
    %264 = vmatpush1.msra.mxu0 0.0
    %265 = vmatprep.subr.mxu0 0.0
    %266 = vmatpush1.msra.mxu0 0.0
    %267 = vmatprep.subr.mxu0 0.0
    %268 = vmatpush1.msra.mxu0 0.0
    %269 = vmatprep.subr.mxu0 0.0
    %270 = vmatpush1.msra.mxu0 0.0
    %271 = vmatprep.subr.mxu0 0.0
    %272 = vmatpush1.msra.mxu0 0.0
    %273 = vmatprep.subr.mxu0 0.0
    %274 = vmatpush1.msra.mxu0 0.0
    %275 = vmatprep.subr.mxu0 0.0
    %276 = vmatpush1.msra.mxu0 0.0
    %277 = vmatprep.subr.mxu0 0.0
    %278 = vmatpush1.msra.mxu0 0.0
    %279 = vmatprep.subr.mxu0 0.0
    %280 = vmatpush1.msra.mxu0 0.0
    %281 = vmatprep.subr.mxu0 0.0
    %282 = vmatpush1.msra.mxu0 0.0
    %283 = vmatprep.subr.mxu0 0.0
    %284 = vmatpush1.msra.mxu0 0.0
    %285 = vmatprep.subr.mxu0 0.0
    %286 = vmatpush1.msra.mxu0 0.0
    %287 = vmatprep.subr.mxu0 0.0
    %288 = vmatpush1.msra.mxu0 0.0
    %289 = vmatprep.subr.mxu0 0.0
    %290 = vmatpush1.msra.mxu0 0.0
    %291 = vmatprep.subr.mxu0 0.0
    %292 = vmatpush1.msra.mxu0 0.0
    %293 = vmatprep.mubr.f32.mxu0 0.0
    %294 = vmatmul.mubr.f32.gmra.mrb[0].mxu0 %v198
    %v295 = vpop.f32.mrb[0].mxu0
    %v296 = vadd.f32 %v227, %v295
    %v297 = vpop.f32.mrb[0].mxu0
    %298 = vmatprep.mubr.f32.mxu0 0.0
    %299 = vmatmul.mubr.f32.gmra.mrb[0].mxu0 %v199
    %v300 = vpop.f32.mrb[0].mxu0
    %v301 = vadd.f32 %v227, %v300
    %v302 = vpop.f32.mrb[0].mxu0
    %303 = vmatprep.mubr.f32.mxu0 0.0
    %304 = vmatmul.mubr.f32.gmra.mrb[0].mxu0 %v200
    %v305 = vpop.f32.mrb[0].mxu0
    %v306 = vadd.f32 %v227, %v305
    %v307 = vpop.f32.mrb[0].mxu0
    %308 = vmatprep.mubr.f32.mxu0 0.0
    %309 = vmatmul.mubr.f32.gmra.mrb[0].mxu0 %v201
    %v310 = vpop.f32.mrb[0].mxu0
    %v311 = vadd.f32 %v227, %v310
    %v312 = vpop.f32.mrb[0].mxu0
    %313 = vmatprep.mubr.f32.mxu0 0.0
    %314 = vmatmul.mubr.f32.gmra.mrb[0].mxu0 %v202
    %v315 = vpop.f32.mrb[0].mxu0
    %v316 = vadd.f32 %v227, %v315
    %v317 = vpop.f32.mrb[0].mxu0
    %318 = vmatprep.mubr.f32.mxu0 0.0
    %319 = vmatmul.mubr.f32.gmra.mrb[0].mxu0 %v203
    %v320 = vpop.f32.mrb[0].mxu0
    %v321 = vadd.f32 %v227, %v320
    %v322 = vpop.f32.mrb[0].mxu0
    %323 = vmatprep.mubr.f32.mxu0 0.0
    %324 = vmatmul.mubr.f32.gmra.mrb[0].mxu0 %v204
    %v325 = vpop.f32.mrb[0].mxu0
    %v326 = vadd.f32 %v227, %v325
    %v327 = vpop.f32.mrb[0].mxu0
    %328 = vmatprep.mubr.f32.mxu0 0.0
    %329 = vmatmul.mubr.f32.gmra.mrb[0].mxu0 %v205
    %v330 = vpop.f32.mrb[0].mxu0
    %v331 = vadd.f32 %v227, %v330
    %v332 = vpop.f32.mrb[0].mxu0
    %333 = vdwg.mxu0
    %v334 = vld [vmem:[%s1] sm:$0xff]
    %v335 = vld [vmem:[%s1 + $0x8] sm:$0xff]
    %v336 = vld [vmem:[%s1 + $0x10] sm:$0xff]
    %v337 = vld [vmem:[%s1 + $0x18] sm:$0xff]
    %v338 = vld [vmem:[%s1 + $0x20] sm:$0xff]
    %v339 = vld [vmem:[%s1 + $0x28] sm:$0xff]
    %v340 = vld [vmem:[%s1 + $0x30] sm:$0xff]
    %v341 = vld [vmem:[%s1 + $0x38] sm:$0xff]
    %v342 = vmul.f32 %v296, 0.5
    %v343 = vmul.f32 %v301, 0.5
    %v344 = vmul.f32 %v306, 0.5
    %v345 = vmul.f32 %v311, 0.5
    %v346 = vmul.f32 %v316, 0.5
    %v347 = vmul.f32 %v321, 0.5
    %v348 = vmul.f32 %v326, 0.5
    %v349 = vmul.f32 %v331, 0.5
    %v350 = vmul.f32 %v342, 1.442695
    %v351 = vpow.pop %v350
    %v352 = vmul.f32 %v343, 1.442695
    %v353 = vpow.pop %v352
    %v354 = vmul.f32 %v344, 1.442695
    %v355 = vpow.pop %v354
    %v356 = vmul.f32 %v345, 1.442695
    %v357 = vpow.pop %v356
    %v358 = vmul.f32 %v346, 1.442695
    %v359 = vpow.pop %v358
    %v360 = vmul.f32 %v347, 1.442695
    %v361 = vpow.pop %v360
    %v362 = vmul.f32 %v348, 1.442695
    %v363 = vpow.pop %v362
    %v364 = vmul.f32 %v349, 1.442695
    %v365 = vpow.pop %v364
    %v366 = vmul.f32 %v334, %v351
    %v367 = vmul.f32 %v335, %v353
    %v368 = vmul.f32 %v336, %v355
    %v369 = vmul.f32 %v337, %v357
    %v370 = vmul.f32 %v338, %v359
    %v371 = vmul.f32 %v339, %v361
    %v372 = vmul.f32 %v340, %v363
    %v373 = vmul.f32 %v341, %v365
    %382 = vrot.lane.b32.xlu0 %v366, 8
    %v383 = vpop.permute.xlu0 %382
    %384 = vrot.lane.b32.xlu0 %v367, 8
    %v385 = vpop.permute.xlu0 %384
    %386 = vrot.lane.b32.xlu0 %v368, 8
    %v387 = vpop.permute.xlu0 %386
    %388 = vrot.lane.b32.xlu0 %v369, 8
    %v389 = vpop.permute.xlu0 %388
    %390 = vrot.lane.b32.xlu0 %v370, 8
    %v391 = vpop.permute.xlu0 %390
    %392 = vrot.lane.b32.xlu0 %v371, 8
    %v393 = vpop.permute.xlu0 %392
    %394 = vrot.lane.b32.xlu0 %v372, 8
    %v395 = vpop.permute.xlu0 %394
    %396 = vrot.lane.b32.xlu0 %v373, 8
    %v397 = vpop.permute.xlu0 %396
    %v406 = vadd.f32 %v296, %v383
    %v407 = vadd.f32 %v301, %v385
    %v408 = vadd.f32 %v306, %v387
    %v409 = vadd.f32 %v311, %v389
    %v410 = vadd.f32 %v316, %v391
    %v411 = vadd.f32 %v321, %v393
    %v412 = vadd.f32 %v326, %v395
    %v413 = vadd.f32 %v331, %v397
    %v414 = vld [vmem:[%s6] sm:$0xff]
    %v415 = vld [vmem:[%s7] sm:$0x1]
    %v417 = vlaneseq
    %v418 = vshrl.u32 %v417, 7
    %v419 = vsub.s32 0, %v418
    %v420 = vrot.slane %v415, %v419
    %430 = vrot.lane.b32.xlu0 %v406, 120
    %v431 = vpop.permute.xlu0 %430
    %432 = vrot.lane.b32.xlu0 %v407, 120
    %v433 = vpop.permute.xlu0 %432
    %434 = vrot.lane.b32.xlu0 %v408, 120
    %v435 = vpop.permute.xlu0 %434
    %436 = vrot.lane.b32.xlu0 %v409, 120
    %v437 = vpop.permute.xlu0 %436
    %438 = vrot.lane.b32.xlu0 %v410, 120
    %v439 = vpop.permute.xlu0 %438
    %440 = vrot.lane.b32.xlu0 %v411, 120
    %v441 = vpop.permute.xlu0 %440
    %442 = vrot.lane.b32.xlu0 %v412, 120
    %v443 = vpop.permute.xlu0 %442
    %444 = vrot.lane.b32.xlu0 %v413, 120
    %v445 = vpop.permute.xlu0 %444
    %vm446 = vcmask 64512
    %v447 = vsel %vm446, %v431, 0
    %v449 = vsel %vm446, %v433, 0
    %v451 = vsel %vm446, %v435, 0
    %v453 = vsel %vm446, %v437, 0
    %v455 = vsel %vm446, %v439, 0
    %v457 = vsel %vm446, %v441, 0
    %v459 = vsel %vm446, %v443, 0
    %v461 = vsel %vm446, %v445, 0
    %463 = vmatprep.subr.mxu0 0.0
    %464 = vmatpush1.msra.mxu0 %v414
    %465 = vmatprep.subr.mxu0 0.0
    %466 = vmatpush1.msra.mxu0 0.0
    %467 = vmatprep.subr.mxu0 0.0
    %468 = vmatpush1.msra.mxu0 0.0
    %469 = vmatprep.subr.mxu0 0.0
    %470 = vmatpush1.msra.mxu0 0.0
    %471 = vmatprep.subr.mxu0 0.0
    %472 = vmatpush1.msra.mxu0 0.0
    %473 = vmatprep.subr.mxu0 0.0
    %474 = vmatpush1.msra.mxu0 0.0
    %475 = vmatprep.subr.mxu0 0.0
    %476 = vmatpush1.msra.mxu0 0.0
    %477 = vmatprep.subr.mxu0 0.0
    %478 = vmatpush1.msra.mxu0 0.0
    %479 = vmatprep.subr.mxu0 0.0
    %480 = vmatpush1.msra.mxu0 0.0
    %481 = vmatprep.subr.mxu0 0.0
    %482 = vmatpush1.msra.mxu0 0.0
    %483 = vmatprep.subr.mxu0 0.0
    %484 = vmatpush1.msra.mxu0 0.0
    %485 = vmatprep.subr.mxu0 0.0
    %486 = vmatpush1.msra.mxu0 0.0
    %487 = vmatprep.subr.mxu0 0.0
    %488 = vmatpush1.msra.mxu0 0.0
    %489 = vmatprep.subr.mxu0 0.0
    %490 = vmatpush1.msra.mxu0 0.0
    %491 = vmatprep.subr.mxu0 0.0
    %492 = vmatpush1.msra.mxu0 0.0
    %493 = vmatprep.subr.mxu0 0.0
    %494 = vmatpush1.msra.mxu0 0.0
    %495 = vmatprep.subr.mxu0 0.0
    %496 = vmatpush1.msra.mxu0 0.0
    %497 = vmatprep.subr.mxu0 0.0
    %498 = vmatpush1.msra.mxu0 0.0
    %499 = vmatprep.subr.mxu0 0.0
    %500 = vmatpush1.msra.mxu0 0.0
    %501 = vmatprep.subr.mxu0 0.0
    %502 = vmatpush1.msra.mxu0 0.0
    %503 = vmatprep.subr.mxu0 0.0
    %504 = vmatpush1.msra.mxu0 0.0
    %505 = vmatprep.subr.mxu0 0.0
    %506 = vmatpush1.msra.mxu0 0.0
    %507 = vmatprep.subr.mxu0 0.0
    %508 = vmatpush1.msra.mxu0 0.0
    %509 = vmatprep.subr.mxu0 0.0
    %510 = vmatpush1.msra.mxu0 0.0
    %511 = vmatprep.subr.mxu0 0.0
    %512 = vmatpush1.msra.mxu0 0.0
    %513 = vmatprep.subr.mxu0 0.0
    %514 = vmatpush1.msra.mxu0 0.0
    %515 = vmatprep.subr.mxu0 0.0
    %516 = vmatpush1.msra.mxu0 0.0
    %517 = vmatprep.subr.mxu0 0.0
    %518 = vmatpush1.msra.mxu0 0.0
    %519 = vmatprep.subr.mxu0 0.0
    %520 = vmatpush1.msra.mxu0 0.0
    %521 = vmatprep.subr.mxu0 0.0
    %522 = vmatpush1.msra.mxu0 0.0
    %523 = vmatprep.subr.mxu0 0.0
    %524 = vmatpush1.msra.mxu0 0.0
    %525 = vmatprep.subr.mxu0 0.0
    %526 = vmatpush1.msra.mxu0 0.0
    %527 = vmatprep.mubr.f32.mxu0 0.0
    %528 = vmatmul.mubr.f32.gmra.mrb[0].mxu0 %v447
    %v529 = vpop.f32.mrb[0].mxu0
    %v530 = vadd.f32 %v420, %v529
    %v531 = vpop.f32.mrb[0].mxu0
    %532 = vmatprep.mubr.f32.mxu0 0.0
    %533 = vmatmul.mubr.f32.gmra.mrb[0].mxu0 %v449
    %v534 = vpop.f32.mrb[0].mxu0
    %v535 = vadd.f32 %v420, %v534
    %v536 = vpop.f32.mrb[0].mxu0
    %537 = vmatprep.mubr.f32.mxu0 0.0
    %538 = vmatmul.mubr.f32.gmra.mrb[0].mxu0 %v451
    %v539 = vpop.f32.mrb[0].mxu0
    %v540 = vadd.f32 %v420, %v539
    %v541 = vpop.f32.mrb[0].mxu0
    %542 = vmatprep.mubr.f32.mxu0 0.0
    %543 = vmatmul.mubr.f32.gmra.mrb[0].mxu0 %v453
    %v544 = vpop.f32.mrb[0].mxu0
    %v545 = vadd.f32 %v420, %v544
    %v546 = vpop.f32.mrb[0].mxu0
    %547 = vmatprep.mubr.f32.mxu0 0.0
    %548 = vmatmul.mubr.f32.gmra.mrb[0].mxu0 %v455
    %v549 = vpop.f32.mrb[0].mxu0
    %v550 = vadd.f32 %v420, %v549
    %v551 = vpop.f32.mrb[0].mxu0
    %552 = vmatprep.mubr.f32.mxu0 0.0
    %553 = vmatmul.mubr.f32.gmra.mrb[0].mxu0 %v457
    %v554 = vpop.f32.mrb[0].mxu0
    %v555 = vadd.f32 %v420, %v554
    %v556 = vpop.f32.mrb[0].mxu0
    %557 = vmatprep.mubr.f32.mxu0 0.0
    %558 = vmatmul.mubr.f32.gmra.mrb[0].mxu0 %v459
    %v559 = vpop.f32.mrb[0].mxu0
    %v560 = vadd.f32 %v420, %v559
    %v561 = vpop.f32.mrb[0].mxu0
    %562 = vmatprep.mubr.f32.mxu0 0.0
    %563 = vmatmul.mubr.f32.gmra.mrb[0].mxu0 %v461
    %v564 = vpop.f32.mrb[0].mxu0
    %v565 = vadd.f32 %v420, %v564
    %v566 = vpop.f32.mrb[0].mxu0
    %567 = vdwg.mxu0
    %v568 = vmax.f32 %v530, 0.0
    %v569 = vmax.f32 %v535, 0.0
    %v570 = vmax.f32 %v540, 0.0
    %v571 = vmax.f32 %v545, 0.0
    %v572 = vmax.f32 %v550, 0.0
    %v573 = vmax.f32 %v555, 0.0
    %v574 = vmax.f32 %v560, 0.0
    %v575 = vmax.f32 %v565, 0.0
    %v576 = vld [vmem:[%s8] sm:$0xff]
    %v577 = vld [vmem:[%s8 + $0x8] sm:$0xff]
    %v578 = vld [vmem:[%s8 + $0x10] sm:$0xff]
    %v579 = vld [vmem:[%s8 + $0x18] sm:$0xff]
    %v580 = vld [vmem:[%s8 + $0x20] sm:$0xff]
    %v581 = vld [vmem:[%s8 + $0x28] sm:$0xff]
    %v582 = vld [vmem:[%s8 + $0x30] sm:$0xff]
    %v583 = vld [vmem:[%s8 + $0x38] sm:$0xff]
    %v584 = vld [vmem:[%s8 + $0x40] sm:$0xff]
    %v585 = vld [vmem:[%s8 + $0x48] sm:$0xff]
    %v586 = vld [vmem:[%s8 + $0x50] sm:$0xff]
    %v587 = vld [vmem:[%s8 + $0x58] sm:$0xff]
    %v588 = vld [vmem:[%s8 + $0x60] sm:$0xff]
    %v589 = vld [vmem:[%s8 + $0x68] sm:$0xff]
    %v590 = vld [vmem:[%s8 + $0x70] sm:$0xff]
    %v591 = vld [vmem:[%s8 + $0x78] sm:$0xff]
    %v592 = vld [vmem:[#allocation5] sm:$0x1]
    %v594 = vlaneseq
    %v595 = vshrl.u32 %v594, 7
    %v596 = vsub.s32 0, %v595
    %v597 = vrot.slane %v592, %v596
    %599 = vmatprep.subr.mxu0 0.0
    %600 = vmatpush1.msra.mxu0 %v576
    %601 = vmatprep.subr.mxu0 0.0
    %602 = vmatpush1.msra.mxu0 %v577
    %603 = vmatprep.subr.mxu0 0.0
    %604 = vmatpush1.msra.mxu0 %v578
    %605 = vmatprep.subr.mxu0 0.0
    %606 = vmatpush1.msra.mxu0 %v579
    %607 = vmatprep.subr.mxu0 0.0
    %608 = vmatpush1.msra.mxu0 %v580
    %609 = vmatprep.subr.mxu0 0.0
    %610 = vmatpush1.msra.mxu0 %v581
    %611 = vmatprep.subr.mxu0 0.0
    %612 = vmatpush1.msra.mxu0 %v582
    %613 = vmatprep.subr.mxu0 0.0
    %614 = vmatpush1.msra.mxu0 %v583
    %615 = vmatprep.subr.mxu0 0.0
    %616 = vmatpush1.msra.mxu0 %v584
    %617 = vmatprep.subr.mxu0 0.0
    %618 = vmatpush1.msra.mxu0 %v585
    %619 = vmatprep.subr.mxu0 0.0
    %620 = vmatpush1.msra.mxu0 %v586
    %621 = vmatprep.subr.mxu0 0.0
    %622 = vmatpush1.msra.mxu0 %v587
    %623 = vmatprep.subr.mxu0 0.0
    %624 = vmatpush1.msra.mxu0 %v588
    %625 = vmatprep.subr.mxu0 0.0
    %626 = vmatpush1.msra.mxu0 %v589
    %627 = vmatprep.subr.mxu0 0.0
    %628 = vmatpush1.msra.mxu0 %v590
    %629 = vmatprep.subr.mxu0 0.0
    %630 = vmatpush1.msra.mxu0 %v591
    %631 = vmatprep.subr.mxu0 0.0
    %632 = vmatpush1.msra.mxu0 0.0
    %633 = vmatprep.subr.mxu0 0.0
    %634 = vmatpush1.msra.mxu0 0.0
    %635 = vmatprep.subr.mxu0 0.0
    %636 = vmatpush1.msra.mxu0 0.0
    %637 = vmatprep.subr.mxu0 0.0
    %638 = vmatpush1.msra.mxu0 0.0
    %639 = vmatprep.subr.mxu0 0.0
    %640 = vmatpush1.msra.mxu0 0.0
    %641 = vmatprep.subr.mxu0 0.0
    %642 = vmatpush1.msra.mxu0 0.0
    %643 = vmatprep.subr.mxu0 0.0
    %644 = vmatpush1.msra.mxu0 0.0
    %645 = vmatprep.subr.mxu0 0.0
    %646 = vmatpush1.msra.mxu0 0.0
    %647 = vmatprep.subr.mxu0 0.0
    %648 = vmatpush1.msra.mxu0 0.0
    %649 = vmatprep.subr.mxu0 0.0
    %650 = vmatpush1.msra.mxu0 0.0
    %651 = vmatprep.subr.mxu0 0.0
    %652 = vmatpush1.msra.mxu0 0.0
    %653 = vmatprep.subr.mxu0 0.0
    %654 = vmatpush1.msra.mxu0 0.0
    %655 = vmatprep.subr.mxu0 0.0
    %656 = vmatpush1.msra.mxu0 0.0
    %657 = vmatprep.subr.mxu0 0.0
    %658 = vmatpush1.msra.mxu0 0.0
    %659 = vmatprep.subr.mxu0 0.0
    %660 = vmatpush1.msra.mxu0 0.0
    %661 = vmatprep.subr.mxu0 0.0
    %662 = vmatpush1.msra.mxu0 0.0
    %663 = vmatprep.mubr.f32.mxu0 0.0
    %664 = vmatmul.mubr.f32.gmra.mrb[0].mxu0 %v568
    %v665 = vpop.f32.mrb[0].mxu0
    %v666 = vadd.f32 %v597, %v665
    %v667 = vpop.f32.mrb[0].mxu0
    %668 = vmatprep.mubr.f32.mxu0 0.0
    %669 = vmatmul.mubr.f32.gmra.mrb[0].mxu0 %v569
    %v670 = vpop.f32.mrb[0].mxu0
    %v671 = vadd.f32 %v597, %v670
    %v672 = vpop.f32.mrb[0].mxu0
    %673 = vmatprep.mubr.f32.mxu0 0.0
    %674 = vmatmul.mubr.f32.gmra.mrb[0].mxu0 %v570
    %v675 = vpop.f32.mrb[0].mxu0
    %v676 = vadd.f32 %v597, %v675
    %v677 = vpop.f32.mrb[0].mxu0
    %678 = vmatprep.mubr.f32.mxu0 0.0
    %679 = vmatmul.mubr.f32.gmra.mrb[0].mxu0 %v571
    %v680 = vpop.f32.mrb[0].mxu0
    %v681 = vadd.f32 %v597, %v680
    %v682 = vpop.f32.mrb[0].mxu0
    %683 = vmatprep.mubr.f32.mxu0 0.0
    %684 = vmatmul.mubr.f32.gmra.mrb[0].mxu0 %v572
    %v685 = vpop.f32.mrb[0].mxu0
    %v686 = vadd.f32 %v597, %v685
    %v687 = vpop.f32.mrb[0].mxu0
    %688 = vmatprep.mubr.f32.mxu0 0.0
    %689 = vmatmul.mubr.f32.gmra.mrb[0].mxu0 %v573
    %v690 = vpop.f32.mrb[0].mxu0
    %v691 = vadd.f32 %v597, %v690
    %v692 = vpop.f32.mrb[0].mxu0
    %693 = vmatprep.mubr.f32.mxu0 0.0
    %694 = vmatmul.mubr.f32.gmra.mrb[0].mxu0 %v574
    %v695 = vpop.f32.mrb[0].mxu0
    %v696 = vadd.f32 %v597, %v695
    %v697 = vpop.f32.mrb[0].mxu0
    %698 = vmatprep.mubr.f32.mxu0 0.0
    %699 = vmatmul.mubr.f32.gmra.mrb[0].mxu0 %v575
    %v700 = vpop.f32.mrb[0].mxu0
    %v701 = vadd.f32 %v597, %v700
    %v702 = vpop.f32.mrb[0].mxu0
    %703 = vdwg.mxu0
    %v704 = vxor.u32 %v666, 2147483648
    %v705 = vxor.u32 %v671, 2147483648
    %v706 = vxor.u32 %v676, 2147483648
    %v707 = vxor.u32 %v681, 2147483648
    %v708 = vxor.u32 %v686, 2147483648
    %v709 = vxor.u32 %v691, 2147483648
    %v710 = vxor.u32 %v696, 2147483648
    %v711 = vxor.u32 %v701, 2147483648
    %v712 = vmul.f32 %v704, 1.442695
    %v713 = vpow.pop %v712
    %v714 = vmul.f32 %v705, 1.442695
    %v715 = vpow.pop %v714
    %v716 = vmul.f32 %v706, 1.442695
    %v717 = vpow.pop %v716
    %v718 = vmul.f32 %v707, 1.442695
    %v719 = vpow.pop %v718
    %v720 = vmul.f32 %v708, 1.442695
    %v721 = vpow.pop %v720
    %v722 = vmul.f32 %v709, 1.442695
    %v723 = vpow.pop %v722
    %v724 = vmul.f32 %v710, 1.442695
    %v725 = vpow.pop %v724
    %v726 = vmul.f32 %v711, 1.442695
    %v727 = vpow.pop %v726
    %v728 = vadd.f32 %v713, 1.0
    %v729 = vadd.f32 %v715, 1.0
    %v730 = vadd.f32 %v717, 1.0
    %v731 = vadd.f32 %v719, 1.0
    %v732 = vadd.f32 %v721, 1.0
    %v733 = vadd.f32 %v723, 1.0
    %v734 = vadd.f32 %v725, 1.0
    %v735 = vadd.f32 %v727, 1.0
    %v736 = vrcp.pop %v728
    %v737 = vmul.f32 1.0, %v736
    %v738 = vrcp.pop %v729
    %v739 = vmul.f32 1.0, %v738
    %v740 = vrcp.pop %v730
    %v741 = vmul.f32 1.0, %v740
    %v742 = vrcp.pop %v731
    %v743 = vmul.f32 1.0, %v742
    %v744 = vrcp.pop %v732
    %v745 = vmul.f32 1.0, %v744
    %v746 = vrcp.pop %v733
    %v747 = vmul.f32 1.0, %v746
    %v748 = vrcp.pop %v734
    %v749 = vmul.f32 1.0, %v748
    %v750 = vrcp.pop %v735
    %v751 = vmul.f32 1.0, %v750
    %760 = vrot.lane.b32.xlu0 %v737, 16
    %v761 = vpop.permute.xlu0 %760
    %762 = vrot.lane.b32.xlu0 %v739, 16
    %v763 = vpop.permute.xlu0 %762
    %764 = vrot.lane.b32.xlu0 %v741, 16
    %v765 = vpop.permute.xlu0 %764
    %766 = vrot.lane.b32.xlu0 %v743, 16
    %v767 = vpop.permute.xlu0 %766
    %768 = vrot.lane.b32.xlu0 %v745, 16
    %v769 = vpop.permute.xlu0 %768
    %770 = vrot.lane.b32.xlu0 %v747, 16
    %v771 = vpop.permute.xlu0 %770
    %772 = vrot.lane.b32.xlu0 %v749, 16
    %v773 = vpop.permute.xlu0 %772
    %774 = vrot.lane.b32.xlu0 %v751, 16
    %v775 = vpop.permute.xlu0 %774
    %vm784 = vcmask 130048
    %v785 = vsel %vm784, %v296, %v761
    %v786 = vsel %vm784, %v301, %v763
    %v787 = vsel %vm784, %v306, %v765
    %v788 = vsel %vm784, %v311, %v767
    %v789 = vsel %vm784, %v316, %v769
    %v790 = vsel %vm784, %v321, %v771
    %v791 = vsel %vm784, %v326, %v773
    %v792 = vsel %vm784, %v331, %v775
    %793 = vst [vmem:[#allocation7] sm:$0xff] %v785
    %794 = vst.msk [vmem:[#allocation7 + $0x8] sm:$0xff] %vm784, %v761
    %795 = vst [vmem:[#allocation7 + $0x10] sm:$0xff] %v786
    %796 = vst.msk [vmem:[#allocation7 + $0x18] sm:$0xff] %vm784, %v763
    %797 = vst [vmem:[#allocation7 + $0x20] sm:$0xff] %v787
    %798 = vst.msk [vmem:[#allocation7 + $0x28] sm:$0xff] %vm784, %v765
    %799 = vst [vmem:[#allocation7 + $0x30] sm:$0xff] %v788
    %800 = vst.msk [vmem:[#allocation7 + $0x38] sm:$0xff] %vm784, %v767
    %801 = vst [vmem:[#allocation7 + $0x40] sm:$0xff] %v789
    %802 = vst.msk [vmem:[#allocation7 + $0x48] sm:$0xff] %vm784, %v769
    %803 = vst [vmem:[#allocation7 + $0x50] sm:$0xff] %v790
    %804 = vst.msk [vmem:[#allocation7 + $0x58] sm:$0xff] %vm784, %v771
    %805 = vst [vmem:[#allocation7 + $0x60] sm:$0xff] %v791
    %806 = vst.msk [vmem:[#allocation7 + $0x68] sm:$0xff] %vm784, %v773
    %807 = vst [vmem:[#allocation7 + $0x70] sm:$0xff] %v792
    %808 = vst.msk [vmem:[#allocation7 + $0x78] sm:$0xff] %vm784, %v775
    // Predicated region
    $region50: #{variational_ae_forward.1} parent=1 // pred_check
      _
    $region51: #{variational_ae_forward.1} parent=1 // pred_check_branch
      %810 = sbr.rel (0) target = $region53
    $region52: #{variational_ae_forward.1} parent=1 // pred_region
      %s812 = ssub.s32 2048, 2048
      %813 = vsyncadd [#allocation4], %s812
      %s814 = sshll.u32 [#allocation7], 4
      %s815 = int_to_ptr.vmem [resolvable:$true] %s814
      %820 = dma.vmem_to_hbm [thread:$0]  %s815, 2048, %s10, [#allocation4], 256, 256, 16
    $region53: #{variational_ae_forward.1} parent=1 // pred_fallthru
      _
    // Predicated region
    $region54: #{variational_ae_forward.1} parent=1 // pred_check
      _
    $region55: #{variational_ae_forward.1} parent=1 // pred_check_branch
      %822 = sbr.rel (0) target = $region57
    $region56: #{variational_ae_forward.1} parent=1 // pred_region
      %823 = dma.done [#allocation4], 2048
    $region57: #{variational_ae_forward.1} parent=1 // pred_fallthru
      _
    %824 = vsyncpa [#allocation3], 1
    %825 = vsyncpa [#allocation6], 1
    %826 = vsyncpa [#allocation4], 1

</llo_original>
